<compile_context>
chip_gen: v5e
topology: v5e:2x2
jax: 0.10.0
libtpu: 0.0.40
codegen_flags: <defaults>
</compile_context>

<pallas_src>
import jax
import jax.numpy as jnp
import numpy as np
from jax.experimental import pallas as pl
from jax.experimental.pallas import tpu as pltpu


# ----------------------------------------------------------------------------------
# Static layout helpers (shared by the offline packer and the kernel).
# ----------------------------------------------------------------------------------
def _up(x, m):
    return (x + m - 1) // m * m


def _gru_offsets(Vp, H):
    rate = _up(Vp + H, 8)          # row holding the `rate` column of W_ih
    bias = _up(rate + 1, 8)        # row holding the fused biases
    rows = _up(bias + 1, 8)
    return {"rate": rate, "bias": bias, "rows": rows}


def _id_offsets(H):
    bid = _up(H, 8)                # row holding fc_id_out bias
    rows = _up(bid + 1, 8)
    return {"bid": bid, "rows": rows}


def _tail_offsets(Vp, H):
    btan = _up(Vp + H, 8)          # tandem_fc bias row
    wrt = _up(btan + 1, 8)         # fc_rate weights over tandem features
    wrr = _up(wrt + 1, 8)          # fc_rate weights over rid features
    brate = _up(wrr + 1, 8)        # fc_rate bias
    rows = _up(brate + 1, 8)
    return {"btan": btan, "wrt": wrt, "wrr": wrr, "brate": brate, "rows": rows}


# ----------------------------------------------------------------------------------
# One-time weight packing: 11 PyTorch-style arrays -> 3 kernel operands.
# ----------------------------------------------------------------------------------
def pack_params(params):
    f32 = jnp.float32
    hi = jax.lax.Precision.HIGHEST
    emb = params["emb"].astype(f32)          # (V, E)
    V, E = emb.shape
    wih = params["wih"].astype(f32)          # (E+1, 3H), gate order (r, z, n)
    bih = params["bih"].astype(f32)          # (1, 3H)
    whh = params["whh"].astype(f32)          # (H, 3H)
    bhh = params["bhh"].astype(f32)          # (1, 3H)
    wid = params["wid"].astype(f32)          # (H, V)
    bid = params["bid"].astype(f32)          # (1, V)
    wtan = params["wtan"].astype(f32)        # (E+H, H)
    btan = params["btan"].astype(f32)        # (1, H)
    wrate = params["wrate"].astype(f32)      # (H+R, 1)
    brate = params["brate"].astype(f32)      # (1, 1)
    H = whh.shape[0]
    R = wrate.shape[0] - H
    Vp = _up(V, 128)
    G = _up(4 * H, 128)

    # -- GRU slab.  Columns: [0:2H] fused (gi+gh) for r,z ; [2H:3H] gi_n ; [3H:4H] gh_n
    #    Rows:    [0:Vp]  folded emb @ W_ih (per-id input contribution)
    #             [Vp:Vp+H] W_hh, [rate] rate column of W_ih, [bias] fused biases.
    go = _gru_offsets(Vp, H)
    t1 = jnp.dot(emb, wih[0:E], precision=hi)                 # (V, 3H)
    w_gru = jnp.zeros((go["rows"], G), f32)
    w_gru = w_gru.at[0:V, 0:3 * H].set(t1)
    w_gru = w_gru.at[Vp:Vp + H, 0:2 * H].set(whh[:, 0:2 * H])
    w_gru = w_gru.at[Vp:Vp + H, 3 * H:4 * H].set(whh[:, 2 * H:3 * H])
    w_gru = w_gru.at[go["rate"], 0:3 * H].set(wih[E])
    w_gru = w_gru.at[go["bias"], 0:2 * H].set(bih[0, 0:2 * H] + bhh[0, 0:2 * H])
    w_gru = w_gru.at[go["bias"], 2 * H:3 * H].set(bih[0, 2 * H:3 * H])
    w_gru = w_gru.at[go["bias"], 3 * H:4 * H].set(bhh[0, 2 * H:3 * H])

    # -- fc_id slab (lane-dense V_pad columns): rows [0:H] W_id, row [bid] bias.
    io = _id_offsets(H)
    w_id = jnp.zeros((io["rows"], Vp), f32)
    w_id = w_id.at[0:H, 0:V].set(wid)
    w_id = w_id.at[io["bid"], 0:V].set(bid[0])

    # -- tail slab (H-wide): folded emb @ W_tan, W_tan(hidden part), btan, fc_rate.
    to = _tail_offsets(Vp, H)
    Ct = max(H, R)
    t2 = jnp.dot(emb, wtan[0:E], precision=hi)                # (V, H)
    w_tail = jnp.zeros((to["rows"], Ct), f32)
    w_tail = w_tail.at[0:V, 0:H].set(t2)
    w_tail = w_tail.at[Vp:Vp + H, 0:H].set(wtan[E:E + H])
    w_tail = w_tail.at[to["btan"], 0:H].set(btan[0])
    w_tail = w_tail.at[to["wrt"], 0:H].set(wrate[0:H, 0])
    w_tail = w_tail.at[to["wrr"], 0:R].set(wrate[H:H + R, 0])
    w_tail = w_tail.at[to["brate"], 0].set(brate[0, 0])

    return {"w_gru": w_gru, "w_id": w_id, "w_tail": w_tail}


# ----------------------------------------------------------------------------------
# Kernel: one grid step == one decoder timestep.  Weights + hidden stay VMEM-resident.
# ----------------------------------------------------------------------------------
def decoder_kernel(
    ids_ref,        # (1, B, 1)  i32   blocked over T
    rate_ref,       # (1, B, 1)  f32   blocked over T
    constr_ref,     # (1, B, Vp) f32   blocked over T (pad cols are 0)
    rid_ref,        # (1, B, R)  f32   blocked over T
    h0_ref,         # (B, H)     f32   constant block (initial hidden)
    w_gru_ref,      # (gru_rows, G)    constant block
    w_id_ref,       # (id_rows, Vp)    constant block
    w_tail_ref,     # (tail_rows, Ct)  constant block
    pred_id_ref,    # (1, B, Vp) out
    pred_rate_ref,  # (1, B, 1)  out
    hidden_out_ref, # (B, H)     out   (written at the last step)
    h_state,        # (B, H)     VMEM scratch: recurrent state across grid steps
):
    t = pl.program_id(0)
    B, H = h_state.shape
    Vp = w_id_ref.shape[1]
    R = rid_ref.shape[2]
    go = _gru_offsets(Vp, H)
    io = _id_offsets(H)
    to = _tail_offsets(Vp, H)

    @pl.when(t == 0)
    def _():
        h_state[...] = h0_ref[...]

    ids = ids_ref[0]                        # (B, 1) i32
    rate = rate_ref[0]                      # (B, 1)
    constr = constr_ref[0]                  # (B, Vp)
    h = h_state[...]                        # (B, H)

    col_v = jax.lax.broadcasted_iota(jnp.int32, (B, Vp), 1)
    onehot = (col_v == ids).astype(jnp.float32)             # input-id one-hot

    # ---- fused single-step GRU: g = [ gi_rz + gh_rz | gi_n | gh_n ] (4H lanes) ----
    g = (jnp.dot(onehot, w_gru_ref[0:Vp, :], preferred_element_type=jnp.float32)
         + jnp.dot(h, w_gru_ref[Vp:Vp + H, :], preferred_element_type=jnp.float32)
         + rate * w_gru_ref[go["rate"]:go["rate"] + 1, :]
         + w_gru_ref[go["bias"]:go["bias"] + 1, :])
    rz = jax.nn.sigmoid(g[:, 0:2 * H])
    r = rz[:, 0:H]
    z = rz[:, H:2 * H]
    n = jnp.tanh(g[:, 2 * H:3 * H] + r * g[:, 3 * H:4 * H])
    h_new = (1.0 - z) * n + z * h
    h_state[...] = h_new

    # ---- fc_id_out -------------------------------------------------------------
    logits = (jnp.dot(h_new, w_id_ref[0:H, :], preferred_element_type=jnp.float32)
              + w_id_ref[io["bid"]:io["bid"] + 1, :])        # (B, Vp)
    allowed = constr > 0.0
    masked_logits = jnp.where(allowed, logits, -jnp.inf)

    # argmax (first occurrence) from masked logits — independent of the softmax sum.
    maxes = jnp.max(masked_logits, axis=1, keepdims=True)
    max_id = jnp.min(jnp.where(masked_logits == maxes, col_v, Vp), axis=1, keepdims=True)
    onehot2 = (col_v == max_id).astype(jnp.float32)

    # masked log-softmax (binary constraint mask, as in the reference model).
    # NB: an all-zero constraint row yields an all -inf row (reference parity).
    shifted = logits - maxes
    x_sum = jnp.sum(jnp.where(allowed, jnp.exp(shifted), 0.0), axis=1, keepdims=True)
    pred_id_ref[0] = jnp.where(allowed, shifted - jnp.log(x_sum), -jnp.inf)

    # ---- tandem_fc: ReLU(emb(max_id) @ Wtan_e + h_new @ Wtan_h + btan) -----------
    tf = (jnp.dot(onehot2, w_tail_ref[0:Vp, 0:H], preferred_element_type=jnp.float32)
          + jnp.dot(h_new, w_tail_ref[Vp:Vp + H, 0:H], preferred_element_type=jnp.float32)
          + w_tail_ref[to["btan"]:to["btan"] + 1, 0:H])
    tf = jnp.maximum(tf, 0.0)

    # ---- fc_rate_out (tandem_fea_flag=True) on the VPU: width-1 output -----------
    rid = rid_ref[0]                                          # (B, R)
    w_t = w_tail_ref[to["wrt"]:to["wrt"] + 1, 0:H]
    w_r = w_tail_ref[to["wrr"]:to["wrr"] + 1, 0:R]
    b_r = w_tail_ref[to["brate"]:to["brate"] + 1, 0:1]
    rate_logit = (jnp.sum(tf * w_t, axis=1, keepdims=True)
                  + jnp.sum(rid * w_r, axis=1, keepdims=True)
                  + b_r)
    pred_rate_ref[0] = jax.nn.sigmoid(rate_logit)

    @pl.when(t == pl.num_programs(0) - 1)
    def _():
        hidden_out_ref[...] = h_new


# ----------------------------------------------------------------------------------
# pallas_call driver
# ----------------------------------------------------------------------------------
def _pallas_decode(w_gru, w_id, w_tail, ids, rates, h0, constr, rid):
    T, B_pad, _ = ids.shape
    H = h0.shape[1]
    Vp = w_id.shape[1]
    R = rid.shape[2]

    step3 = lambda t: (t, 0, 0)
    const2 = lambda t: (0, 0)

    grid_spec = pltpu.PrefetchScalarGridSpec(
        num_scalar_prefetch=0,
        grid=(T,),
        in_specs=[
            pl.BlockSpec((1, B_pad, 1), step3),        # ids
            pl.BlockSpec((1, B_pad, 1), step3),        # rates
            pl.BlockSpec((1, B_pad, Vp), step3),       # constraint (lane-dense)
            pl.BlockSpec((1, B_pad, R), step3),        # rid features
            pl.BlockSpec((B_pad, H), const2),          # initial hidden
            pl.BlockSpec(w_gru.shape, const2),         # GRU slab   (no re-DMA per step)
            pl.BlockSpec(w_id.shape, const2),          # fc_id slab
            pl.BlockSpec(w_tail.shape, const2),        # tandem/rate tail slab
        ],
        out_specs=(
            pl.BlockSpec((1, B_pad, Vp), step3),       # pred_id (lane-dense)
            pl.BlockSpec((1, B_pad, 1), step3),        # pred_rate
            pl.BlockSpec((B_pad, H), const2),          # final hidden
        ),
        scratch_shapes=[pltpu.VMEM((B_pad, H), jnp.float32)],   # recurrent state
    )
    return pl.pallas_call(
        decoder_kernel,
        out_shape=(
            jax.ShapeDtypeStruct((T, B_pad, Vp), jnp.float32),
            jax.ShapeDtypeStruct((T, B_pad, 1), jnp.float32),
            jax.ShapeDtypeStruct((B_pad, H), jnp.float32),
        ),
        grid_spec=grid_spec,
        compiler_params=pltpu.CompilerParams(
            dimension_semantics=("arbitrary",),        # recurrence over T
            vmem_limit_bytes=32 * 1024 * 1024,         # explicit budget (v7x: 64 MiB phys)
        ),
    )(ids, rates, constr, rid, h0, w_gru, w_id, w_tail)


def _decode_seq_padded(packed, ids, rates, h0, constr, rid):
    """ids/rates: (T,B), h0: (B,H), constr: (T,B,V), rid: (T,B,R)."""
    w_gru, w_id, w_tail = packed["w_gru"], packed["w_id"], packed["w_tail"]
    T, B = ids.shape
    H = h0.shape[-1]
    V = constr.shape[-1]
    R = rid.shape[-1]
    Vp = w_id.shape[1]
    B_pad = max(_up(B, 8), 8)

    ids_p = jnp.zeros((T, B_pad, 1), jnp.int32).at[:, :B, 0].set(ids.astype(jnp.int32))
    rates_p = jnp.zeros((T, B_pad, 1), jnp.float32).at[:, :B, 0].set(rates.astype(jnp.float32))
    h0_p = jnp.zeros((B_pad, H), jnp.float32).at[:B, :].set(h0.astype(jnp.float32))
    constr_p = jnp.zeros((T, B_pad, Vp), jnp.float32).at[:, :B, :V].set(constr.astype(jnp.float32))
    constr_p = constr_p.at[:, B:, 0].set(1.0)          # keep padded batch rows finite
    rid_p = jnp.zeros((T, B_pad, R), jnp.float32).at[:, :B, :].set(rid.astype(jnp.float32))

    pid, prate, hout = _pallas_decode(w_gru, w_id, w_tail, ids_p, rates_p, h0_p, constr_p, rid_p)
    return pid[:, :B, :V], prate[:, :B, :], hout[:B, :]


@jax.jit
def decoder_forward(packed, input_id, input_rate, hidden, constraint_vec, rid_features):
    """Exact DecoderMulti.forward (single step, eval mode)."""
    B = input_id.shape[0]
    H = hidden.shape[-1]
    V = constraint_vec.shape[-1]
    R = rid_features.shape[-1]
    pid, prate, h_new = _decode_seq_padded(
        packed,
        input_id.reshape(1, B),
        input_rate.reshape(1, B),
        hidden.reshape(B, H),
        constraint_vec.reshape(1, B, V),
        rid_features.reshape(1, B, R),
    )
    return pid[0], prate[0], h_new.reshape(1, B, H)


@jax.jit
def decoder_forward_seq(packed, ids_seq, rates_seq, hidden0, constr_seq, rid_seq):
    """T teacher-forced decoder steps in ONE pallas_call (weights stay VMEM-resident)."""
    B = ids_seq.shape[1]
    H = hidden0.shape[-1]
    pid, prate, h_new = _decode_seq_padded(
        packed, ids_seq, rates_seq, hidden0.reshape(B, H), constr_seq, rid_seq)
    return pid, prate, h_new.reshape(1, B, H)


# ----------------------------------------------------------------------------------
# Pure-JAX reference mirroring the PyTorch forward (eval mode), on UNPACKED params.
# ----------------------------------------------------------------------------------
def decoder_ref(params, input_id, input_rate, hidden, constraint_vec, rid_features):
    B = input_id.shape[0]
    H = params["whh"].shape[0]
    embedded = params["emb"][input_id.reshape(-1)]                 # (B, E)
    x = jnp.concatenate([embedded, input_rate.reshape(B, 1)], axis=1)
    h = hidden.reshape(B, H)
    gi = x @ params["wih"] + params["bih"]
    gh = h @ params["whh"] + params["bhh"]
    r = jax.nn.sigmoid(gi[:, :H] + gh[:, :H])
    z = jax.nn.sigmoid(gi[:, H:2 * H] + gh[:, H:2 * H])
    n = jnp.tanh(gi[:, 2 * H:] + r * gh[:, 2 * H:])
    h_new = (1.0 - z) * n + z * h
    logits = h_new @ params["wid"] + params["bid"]
    maxes = jnp.max(logits, axis=1, keepdims=True)
    x_exp = jnp.exp(logits - maxes) * constraint_vec
    pred_id = jnp.log(x_exp / jnp.sum(x_exp, axis=1, keepdims=True))
    max_id = jnp.argmax(pred_id, axis=1)
    id_emb = params["emb"][max_id]
    rate_in = jnp.concatenate([id_emb, h_new], axis=1)
    t = jax.nn.relu(rate_in @ params["wtan"] + params["btan"])
    cat = jnp.concatenate([t, rid_features], axis=1)
    pred_rate = jax.nn.sigmoid(cat @ params["wrate"] + params["brate"])
    return pred_id, pred_rate, h_new.reshape(1, B, H)


def init_params(key, id_size, id_emb_dim, hid_dim, rid_fea_dim):
    ks = jax.random.split(key, 12)
    s = 0.1
    f = jnp.float32
    return {
        "emb":   (s * jax.random.normal(ks[0], (id_size, id_emb_dim))).astype(f),
        "wih":   (s * jax.random.normal(ks[1], (id_emb_dim + 1, 3 * hid_dim))).astype(f),
        "bih":   (s * jax.random.normal(ks[2], (1, 3 * hid_dim))).astype(f),
        "whh":   (s * jax.random.normal(ks[3], (hid_dim, 3 * hid_dim))).astype(f),
        "bhh":   (s * jax.random.normal(ks[4], (1, 3 * hid_dim))).astype(f),
        "wid":   (s * jax.random.normal(ks[5], (hid_dim, id_size))).astype(f),
        "bid":   (s * jax.random.normal(ks[6], (1, id_size))).astype(f),
        "wtan":  (s * jax.random.normal(ks[7], (id_emb_dim + hid_dim, hid_dim))).astype(f),
        "btan":  (s * jax.random.normal(ks[8], (1, hid_dim))).astype(f),
        "wrate": (s * jax.random.normal(ks[9], (hid_dim + rid_fea_dim, 1))).astype(f),
        "brate": (s * jax.random.normal(ks[10], (1, 1))).astype(f),
    }


if __name__ == "__main__":
    B, ID_SIZE, ID_EMB, HID, RID_FEA, T = 2, 64, 16, 32, 8, 4

    key = jax.random.PRNGKey(0)
    kp, k1, k2, k3, k4, k5, k6, k7, k8, k9 = jax.random.split(key, 10)
    params = init_params(kp, ID_SIZE, ID_EMB, HID, RID_FEA)
    packed = pack_params(params)          # one-time weight packing (3 slabs)

    # --- single step: exact DecoderMulti.forward parity ---------------------------
    input_id = jax.random.randint(k1, (B, 1), 0, ID_SIZE, dtype=jnp.int32)
    input_rate = jax.random.uniform(k2, (B, 1), dtype=jnp.float32)
    hidden = jax.random.normal(k3, (1, B, HID), dtype=jnp.float32)
    constraint_vec = (jax.random.uniform(k4, (B, ID_SIZE)) > 0.3).astype(jnp.float32)
    constraint_vec = constraint_vec.at[:, 0].set(1.0)          # >=1 admissible id per row
    rid_features = jax.random.normal(k5, (B, RID_FEA), dtype=jnp.float32)
    # encoder_outputs / attn_mask / pre_grid / next_grid / pro_features /
    # online_features are unused by this forward pass, so they are omitted.

    pred_id, pred_rate, h_out = decoder_forward(
        packed, input_id, input_rate, hidden, constraint_vec, rid_features)
    jax.block_until_ready((pred_id, pred_rate, h_out))

    ref_id, ref_rate, ref_h = decoder_ref(
        params, input_id, input_rate, hidden, constraint_vec, rid_features)
    np.testing.assert_allclose(np.asarray(pred_id), np.asarray(ref_id), rtol=2e-5, atol=2e-5)
    np.testing.assert_allclose(np.asarray(pred_rate), np.asarray(ref_rate), rtol=2e-5, atol=2e-5)
    np.testing.assert_allclose(np.asarray(h_out), np.asarray(ref_h), rtol=2e-5, atol=2e-5)

    # --- T teacher-forced steps in ONE pallas_call (weights VMEM-resident) --------
    ids_seq = jax.random.randint(k6, (T, B), 0, ID_SIZE, dtype=jnp.int32)
    rates_seq = jax.random.uniform(k7, (T, B), dtype=jnp.float32)
    constr_seq = (jax.random.uniform(k8, (T, B, ID_SIZE)) > 0.3).astype(jnp.float32)
    constr_seq = constr_seq.at[..., 0].set(1.0)
    rid_seq = jax.random.normal(k9, (T, B, RID_FEA), dtype=jnp.float32)

    sid, srate, sh = decoder_forward_seq(packed, ids_seq, rates_seq, hidden, constr_seq, rid_seq)
    jax.block_until_ready((sid, srate, sh))

    h = hidden
    ref_ids, ref_rates = [], []
    for t in range(T):
        rid_t, rr_t, h = decoder_ref(params, ids_seq[t], rates_seq[t], h,
                                     constr_seq[t], rid_seq[t])
        ref_ids.append(np.asarray(rid_t))
        ref_rates.append(np.asarray(rr_t))
    np.testing.assert_allclose(np.asarray(sid), np.stack(ref_ids), rtol=1e-4, atol=1e-4)
    np.testing.assert_allclose(np.asarray(srate), np.stack(ref_rates), rtol=1e-4, atol=1e-4)
    np.testing.assert_allclose(np.asarray(sh), np.asarray(h), rtol=1e-4, atol=1e-4)

    print("KERNEL_OK")
</pallas_src>

<mosaic_0001>
module attributes {stable_mosaic.version = 11 : i64} {
  func.func @decoder_kernel(%arg0: i32, %arg1: memref<1x8x1xi32, #tpu.memory_space<vmem>>, %arg2: memref<1x8x1xf32, #tpu.memory_space<vmem>>, %arg3: memref<1x8x128xf32, #tpu.memory_space<vmem>>, %arg4: memref<1x8x8xf32, #tpu.memory_space<vmem>>, %arg5: memref<8x32xf32, #tpu.memory_space<vmem>>, %arg6: memref<176x128xf32, #tpu.memory_space<vmem>>, %arg7: memref<40x128xf32, #tpu.memory_space<vmem>>, %arg8: memref<192x32xf32, #tpu.memory_space<vmem>>, %arg9: memref<1x8x128xf32, #tpu.memory_space<vmem>>, %arg10: memref<1x8x1xf32, #tpu.memory_space<vmem>>, %arg11: memref<8x32xf32, #tpu.memory_space<vmem>>, %arg12: memref<8x32xf32, #tpu.memory_space<vmem>>) attributes {dimension_semantics = [#tpu.dimension_semantics<arbitrary>], iteration_bounds = array<i64: 1>, scalar_prefetch = 0 : i64, scratch_operands = 1 : i64, tpu.core_type = #tpu.core_type<tc>, window_params = [{transform_indices = @transform_0, window_bounds = array<i64: 1, 8, 1>}, {transform_indices = @transform_1, window_bounds = array<i64: 1, 8, 1>}, {transform_indices = @transform_2, window_bounds = array<i64: 1, 8, 128>}, {transform_indices = @transform_3, window_bounds = array<i64: 1, 8, 8>}, {pipeline_mode = #tpu.pipeline_mode<synchronous>, transform_indices = @transform_4, window_bounds = array<i64: 8, 32>}, {pipeline_mode = #tpu.pipeline_mode<synchronous>, transform_indices = @transform_5, window_bounds = array<i64: 176, 128>}, {pipeline_mode = #tpu.pipeline_mode<synchronous>, transform_indices = @transform_6, window_bounds = array<i64: 40, 128>}, {pipeline_mode = #tpu.pipeline_mode<synchronous>, transform_indices = @transform_7, window_bounds = array<i64: 192, 32>}, {transform_indices = @transform_8, window_bounds = array<i64: 1, 8, 128>}, {transform_indices = @transform_9, window_bounds = array<i64: 1, 8, 1>}, {pipeline_mode = #tpu.pipeline_mode<synchronous>, transform_indices = @transform_10, window_bounds = array<i64: 8, 32>}]} {
    %c0_i32 = arith.constant 0 : i32
    %0 = arith.cmpi eq, %arg0, %c0_i32 : i32
    %1 = arith.extui %0 : i1 to i32
    %c0_i32_0 = arith.constant 0 : i32
    %2 = arith.cmpi ne, %1, %c0_i32_0 : i32
    scf.if %2 {
      %c0_59 = arith.constant 0 : index
      %c0_60 = arith.constant 0 : index
      %120 = vector.load %arg5[%c0_59, %c0_60] : memref<8x32xf32, #tpu.memory_space<vmem>>, vector<8x32xf32>
      %c0_61 = arith.constant 0 : index
      %c0_62 = arith.constant 0 : index
      %121 = vector.load %arg12[%c0_61, %c0_62] : memref<8x32xf32, #tpu.memory_space<vmem>>, vector<8x32xf32>
      tpu.vector_store %arg12[%c0_61, %c0_62], %120 {strides = array<i32>} : memref<8x32xf32, #tpu.memory_space<vmem>>, vector<8x32xf32>,
    } else {
    }
    %c0 = arith.constant 0 : index
    %c0_1 = arith.constant 0 : index
    %c0_2 = arith.constant 0 : index
    %3 = vector.load %arg1[%c0, %c0_1, %c0_2] : memref<1x8x1xi32, #tpu.memory_space<vmem>>, vector<1x8x1xi32>
    %4 = vector.shape_cast %3 : vector<1x8x1xi32> to vector<8x1xi32>
    %c0_3 = arith.constant 0 : index
    %c0_4 = arith.constant 0 : index
    %c0_5 = arith.constant 0 : index
    %5 = vector.load %arg2[%c0_3, %c0_4, %c0_5] : memref<1x8x1xf32, #tpu.memory_space<vmem>>, vector<1x8x1xf32>
    %6 = vector.shape_cast %5 : vector<1x8x1xf32> to vector<8x1xf32>
    %c0_6 = arith.constant 0 : index
    %c0_7 = arith.constant 0 : index
    %c0_8 = arith.constant 0 : index
    %7 = vector.load %arg3[%c0_6, %c0_7, %c0_8] : memref<1x8x128xf32, #tpu.memory_space<vmem>>, vector<1x8x128xf32>
    %8 = vector.shape_cast %7 : vector<1x8x128xf32> to vector<8x128xf32>
    %c0_9 = arith.constant 0 : index
    %c0_10 = arith.constant 0 : index
    %9 = vector.load %arg12[%c0_9, %c0_10] : memref<8x32xf32, #tpu.memory_space<vmem>>, vector<8x32xf32>
    %10 = tpu.iota {dimensions = array<i32: 1>} : vector<8x128xi32>
    %11 = vector.broadcast %4 : vector<8x1xi32> to vector<8x128xi32>
    %12 = arith.cmpi eq, %10, %11 : vector<8x128xi32>
    %13 = arith.extui %12 : vector<8x128xi1> to vector<8x128xi32>
    %14 = arith.sitofp %13 : vector<8x128xi32> to vector<8x128xf32>
    %c0_11 = arith.constant 0 : index
    %c0_12 = arith.constant 0 : index
    %15 = vector.load %arg6[%c0_11, %c0_12] : memref<176x128xf32, #tpu.memory_space<vmem>>, vector<128x128xf32>
    %cst = arith.constant dense<0.000000e+00> : vector<8x128xf32>
    %16 = tpu.matmul %14, %15, %cst {dimension_numbers = #tpu.dot_dimension_numbers<[1], [0], [0], [1], [0, 0, 1, 1], [], []>} : vector<8x128xf32>, vector<128x128xf32>, vector<8x128xf32> -> vector<8x128xf32>
    %c128 = arith.constant 128 : index
    %c0_13 = arith.constant 0 : index
    %17 = vector.load %arg6[%c128, %c0_13] : memref<176x128xf32, #tpu.memory_space<vmem>>, vector<32x128xf32>
    %cst_14 = arith.constant dense<0.000000e+00> : vector<8x128xf32>
    %18 = tpu.matmul %9, %17, %cst_14 {dimension_numbers = #tpu.dot_dimension_numbers<[1], [0], [0], [1], [0, 0, 1, 1], [], []>} : vector<8x32xf32>, vector<32x128xf32>, vector<8x128xf32> -> vector<8x128xf32>
    %19 = arith.addf %16, %18 : vector<8x128xf32>
    %c160 = arith.constant 160 : index
    %c0_15 = arith.constant 0 : index
    %20 = vector.load %arg6[%c160, %c0_15] : memref<176x128xf32, #tpu.memory_space<vmem>>, vector<1x128xf32>
    %21 = vector.broadcast %6 : vector<8x1xf32> to vector<8x128xf32>
    %22 = vector.broadcast %20 : vector<1x128xf32> to vector<8x128xf32>
    %23 = arith.mulf %21, %22 : vector<8x128xf32>
    %24 = arith.addf %19, %23 : vector<8x128xf32>
    %c168 = arith.constant 168 : index
    %c0_16 = arith.constant 0 : index
    %25 = vector.load %arg6[%c168, %c0_16] : memref<176x128xf32, #tpu.memory_space<vmem>>, vector<1x128xf32>
    %26 = vector.broadcast %25 : vector<1x128xf32> to vector<8x128xf32>
    %27 = arith.addf %24, %26 : vector<8x128xf32>
    %28 = vector.extract_strided_slice %27 {offsets = [0, 0], sizes = [8, 64], strides = [1, 1]} : vector<8x128xf32> to vector<8x64xf32>
    %29 = arith.negf %28 : vector<8x64xf32>
    %30 = math.exp %29 : vector<8x64xf32>
    %cst_17 = arith.constant 1.000000e+00 : f32
    %31 = vector.broadcast %cst_17 : f32 to vector<8x64xf32>
    %32 = arith.addf %31, %30 : vector<8x64xf32>
    %33 = arith.divf %31, %32 : vector<8x64xf32>
    %34 = vector.extract_strided_slice %33 {offsets = [0, 0], sizes = [8, 32], strides = [1, 1]} : vector<8x64xf32> to vector<8x32xf32>
    %35 = vector.extract_strided_slice %33 {offsets = [0, 32], sizes = [8, 32], strides = [1, 1]} : vector<8x64xf32> to vector<8x32xf32>
    %36 = vector.extract_strided_slice %27 {offsets = [0, 64], sizes = [8, 32], strides = [1, 1]} : vector<8x128xf32> to vector<8x32xf32>
    %37 = vector.extract_strided_slice %27 {offsets = [0, 96], sizes = [8, 32], strides = [1, 1]} : vector<8x128xf32> to vector<8x32xf32>
    %38 = arith.mulf %34, %37 : vector<8x32xf32>
    %39 = arith.addf %36, %38 : vector<8x32xf32>
    %40 = math.tanh %39 : vector<8x32xf32>
    %cst_18 = arith.constant 1.000000e+00 : f32
    %41 = vector.broadcast %cst_18 : f32 to vector<8x32xf32>
    %42 = arith.subf %41, %35 : vector<8x32xf32>
    %43 = arith.mulf %42, %40 : vector<8x32xf32>
    %44 = arith.mulf %35, %9 : vector<8x32xf32>
    %45 = arith.addf %43, %44 : vector<8x32xf32>
    %c0_19 = arith.constant 0 : index
    %c0_20 = arith.constant 0 : index
    %46 = vector.load %arg12[%c0_19, %c0_20] : memref<8x32xf32, #tpu.memory_space<vmem>>, vector<8x32xf32>
    tpu.vector_store %arg12[%c0_19, %c0_20], %45 {strides = array<i32>} : memref<8x32xf32, #tpu.memory_space<vmem>>, vector<8x32xf32>,
    %c0_21 = arith.constant 0 : index
    %c0_22 = arith.constant 0 : index
    %47 = vector.load %arg7[%c0_21, %c0_22] : memref<40x128xf32, #tpu.memory_space<vmem>>, vector<32x128xf32>
    %cst_23 = arith.constant dense<0.000000e+00> : vector<8x128xf32>
    %48 = tpu.matmul %45, %47, %cst_23 {dimension_numbers = #tpu.dot_dimension_numbers<[1], [0], [0], [1], [0, 0, 1, 1], [], []>} : vector<8x32xf32>, vector<32x128xf32>, vector<8x128xf32> -> vector<8x128xf32>
    %c32 = arith.constant 32 : index
    %c0_24 = arith.constant 0 : index
    %49 = vector.load %arg7[%c32, %c0_24] : memref<40x128xf32, #tpu.memory_space<vmem>>, vector<1x128xf32>
    %50 = vector.broadcast %49 : vector<1x128xf32> to vector<8x128xf32>
    %51 = arith.addf %48, %50 : vector<8x128xf32>
    %cst_25 = arith.constant 0.000000e+00 : f32
    %52 = vector.broadcast %cst_25 : f32 to vector<8x128xf32>
    %53 = arith.cmpf ogt, %8, %52 : vector<8x128xf32>
    %cst_26 = arith.constant 0xFF800000 : f32
    %54 = vector.broadcast %cst_26 : f32 to vector<8x128xf32>
    %55 = arith.select %53, %51, %54 : vector<8x128xi1>, vector<8x128xf32>
    %cst_27 = arith.constant dense<0xFF800000> : vector<8xf32>
    %56 = vector.multi_reduction <maximumf>, %55, %cst_27 [1] : vector<8x128xf32> to vector<8xf32>
    %57 = vector.shape_cast %56 : vector<8xf32> to vector<8x1xf32>
    %58 = vector.broadcast %57 : vector<8x1xf32> to vector<8x128xf32>
    %59 = arith.cmpf oeq, %55, %58 : vector<8x128xf32>
    %c128_i32 = arith.constant 128 : i32
    %60 = vector.broadcast %c128_i32 : i32 to vector<8x128xi32>
    %61 = arith.select %59, %10, %60 : vector<8x128xi1>, vector<8x128xi32>
    %cst_28 = arith.constant dense<2147483647> : vector<8xi32>
    %62 = vector.multi_reduction <minsi>, %61, %cst_28 [1] : vector<8x128xi32> to vector<8xi32>
    %63 = vector.shape_cast %62 : vector<8xi32> to vector<8x1xi32>
    %64 = vector.broadcast %63 : vector<8x1xi32> to vector<8x128xi32>
    %65 = arith.cmpi eq, %10, %64 : vector<8x128xi32>
    %66 = arith.extui %65 : vector<8x128xi1> to vector<8x128xi32>
    %67 = arith.sitofp %66 : vector<8x128xi32> to vector<8x128xf32>
    %68 = vector.broadcast %57 : vector<8x1xf32> to vector<8x128xf32>
    %69 = arith.subf %51, %68 : vector<8x128xf32>
    %70 = math.exp %69 : vector<8x128xf32>
    %cst_29 = arith.constant 0.000000e+00 : f32
    %71 = vector.broadcast %cst_29 : f32 to vector<8x128xf32>
    %72 = arith.select %53, %70, %71 : vector<8x128xi1>, vector<8x128xf32>
    %cst_30 = arith.constant dense<0.000000e+00> : vector<8xf32>
    %73 = vector.multi_reduction <add>, %72, %cst_30 [1] : vector<8x128xf32> to vector<8xf32>
    %74 = vector.shape_cast %73 : vector<8xf32> to vector<8x1xf32>
    %75 = math.log %74 : vector<8x1xf32>
    %76 = vector.broadcast %75 : vector<8x1xf32> to vector<8x128xf32>
    %77 = arith.subf %69, %76 : vector<8x128xf32>
    %cst_31 = arith.constant 0xFF800000 : f32
    %78 = vector.broadcast %cst_31 : f32 to vector<8x128xf32>
    %79 = arith.select %53, %77, %78 : vector<8x128xi1>, vector<8x128xf32>
    %c0_32 = arith.constant 0 : index
    %c0_33 = arith.constant 0 : index
    %c0_34 = arith.constant 0 : index
    %80 = vector.load %arg9[%c0_32, %c0_33, %c0_34] : memref<1x8x128xf32, #tpu.memory_space<vmem>>, vector<1x8x128xf32>
    %81 = vector.shape_cast %80 : vector<1x8x128xf32> to vector<8x128xf32>
    %82 = vector.shape_cast %79 : vector<8x128xf32> to vector<1x8x128xf32>
    tpu.vector_store %arg9[%c0_32, %c0_33, %c0_34], %82 {strides = array<i32>} : memref<1x8x128xf32, #tpu.memory_space<vmem>>, vector<1x8x128xf32>,
    %c0_35 = arith.constant 0 : index
    %c0_36 = arith.constant 0 : index
    %83 = vector.load %arg8[%c0_35, %c0_36] : memref<192x32xf32, #tpu.memory_space<vmem>>, vector<128x32xf32>
    %cst_37 = arith.constant dense<0.000000e+00> : vector<8x32xf32>
    %84 = tpu.matmul %67, %83, %cst_37 {dimension_numbers = #tpu.dot_dimension_numbers<[1], [0], [0], [1], [0, 0, 1, 1], [], []>} : vector<8x128xf32>, vector<128x32xf32>, vector<8x32xf32> -> vector<8x32xf32>
    %c128_38 = arith.constant 128 : index
    %c0_39 = arith.constant 0 : index
    %85 = vector.load %arg8[%c128_38, %c0_39] : memref<192x32xf32, #tpu.memory_space<vmem>>, vector<32x32xf32>
    %cst_40 = arith.constant dense<0.000000e+00> : vector<8x32xf32>
    %86 = tpu.matmul %45, %85, %cst_40 {dimension_numbers = #tpu.dot_dimension_numbers<[1], [0], [0], [1], [0, 0, 1, 1], [], []>} : vector<8x32xf32>, vector<32x32xf32>, vector<8x32xf32> -> vector<8x32xf32>
    %87 = arith.addf %84, %86 : vector<8x32xf32>
    %c160_41 = arith.constant 160 : index
    %c0_42 = arith.constant 0 : index
    %88 = vector.load %arg8[%c160_41, %c0_42] : memref<192x32xf32, #tpu.memory_space<vmem>>, vector<1x32xf32>
    %89 = vector.broadcast %88 : vector<1x32xf32> to vector<8x32xf32>
    %90 = arith.addf %87, %89 : vector<8x32xf32>
    %cst_43 = arith.constant 0.000000e+00 : f32
    %91 = vector.broadcast %cst_43 : f32 to vector<8x32xf32>
    %92 = arith.maximumf %90, %91 : vector<8x32xf32>
    %c0_44 = arith.constant 0 : index
    %c0_45 = arith.constant 0 : index
    %c0_46 = arith.constant 0 : index
    %93 = vector.load %arg4[%c0_44, %c0_45, %c0_46] : memref<1x8x8xf32, #tpu.memory_space<vmem>>, vector<1x8x8xf32>
    %94 = vector.shape_cast %93 : vector<1x8x8xf32> to vector<8x8xf32>
    %c168_47 = arith.constant 168 : index
    %c0_48 = arith.constant 0 : index
    %95 = vector.load %arg8[%c168_47, %c0_48] : memref<192x32xf32, #tpu.memory_space<vmem>>, vector<1x32xf32>
    %c176 = arith.constant 176 : index
    %c0_49 = arith.constant 0 : index
    %96 = vector.load %arg8[%c176, %c0_49] : memref<192x32xf32, #tpu.memory_space<vmem>>, vector<1x8xf32>
    %c184 = arith.constant 184 : index
    %c0_50 = arith.constant 0 : index
    %97 = vector.load %arg8[%c184, %c0_50] : memref<192x32xf32, #tpu.memory_space<vmem>>, vector<1x1xf32>
    %98 = vector.broadcast %95 : vector<1x32xf32> to vector<8x32xf32>
    %99 = arith.mulf %92, %98 : vector<8x32xf32>
    %cst_51 = arith.constant dense<0.000000e+00> : vector<8xf32>
    %100 = vector.multi_reduction <add>, %99, %cst_51 [1] : vector<8x32xf32> to vector<8xf32>
    %101 = vector.shape_cast %100 : vector<8xf32> to vector<8x1xf32>
    %102 = vector.broadcast %96 : vector<1x8xf32> to vector<8x8xf32>
    %103 = arith.mulf %94, %102 : vector<8x8xf32>
    %cst_52 = arith.constant dense<0.000000e+00> : vector<8xf32>
    %104 = vector.multi_reduction <add>, %103, %cst_52 [1] : vector<8x8xf32> to vector<8xf32>
    %105 = vector.shape_cast %104 : vector<8xf32> to vector<8x1xf32>
    %106 = arith.addf %101, %105 : vector<8x1xf32>
    %107 = vector.broadcast %97 : vector<1x1xf32> to vector<8x1xf32>
    %108 = arith.addf %106, %107 : vector<8x1xf32>
    %109 = arith.negf %108 : vector<8x1xf32>
    %110 = math.exp %109 : vector<8x1xf32>
    %cst_53 = arith.constant 1.000000e+00 : f32
    %111 = vector.broadcast %cst_53 : f32 to vector<8x1xf32>
    %112 = arith.addf %111, %110 : vector<8x1xf32>
    %113 = arith.divf %111, %112 : vector<8x1xf32>
    %c0_54 = arith.constant 0 : index
    %c0_55 = arith.constant 0 : index
    %c0_56 = arith.constant 0 : index
    %114 = vector.load %arg10[%c0_54, %c0_55, %c0_56] : memref<1x8x1xf32, #tpu.memory_space<vmem>>, vector<1x8x1xf32>
    %115 = vector.shape_cast %114 : vector<1x8x1xf32> to vector<8x1xf32>
    %116 = vector.shape_cast %113 : vector<8x1xf32> to vector<1x8x1xf32>
    tpu.vector_store %arg10[%c0_54, %c0_55, %c0_56], %116 {strides = array<i32>} : memref<1x8x1xf32, #tpu.memory_space<vmem>>, vector<1x8x1xf32>,
    %c0_i32_57 = arith.constant 0 : i32
    %117 = arith.cmpi eq, %arg0, %c0_i32_57 : i32
    %118 = arith.extui %117 : i1 to i32
    %c0_i32_58 = arith.constant 0 : i32
    %119 = arith.cmpi ne, %118, %c0_i32_58 : i32
    scf.if %119 {
      %c0_59 = arith.constant 0 : index
      %c0_60 = arith.constant 0 : index
      %120 = vector.load %arg11[%c0_59, %c0_60] : memref<8x32xf32, #tpu.memory_space<vmem>>, vector<8x32xf32>
      tpu.vector_store %arg11[%c0_59, %c0_60], %45 {strides = array<i32>} : memref<8x32xf32, #tpu.memory_space<vmem>>, vector<8x32xf32>,
    } else {
    }
    return
  }
  func.func @transform_0(%arg0: i32) -> (i32, i32, i32) {
    %c0_i32 = arith.constant 0 : i32
    %c0_i32_0 = arith.constant 0 : i32
    %c0_i32_1 = arith.constant 0 : i32
    return %arg0, %c0_i32, %c0_i32_0 : i32, i32, i32
  }
  func.func @transform_1(%arg0: i32) -> (i32, i32, i32) {
    %c0_i32 = arith.constant 0 : i32
    %c0_i32_0 = arith.constant 0 : i32
    %c0_i32_1 = arith.constant 0 : i32
    return %arg0, %c0_i32, %c0_i32_0 : i32, i32, i32
  }
  func.func @transform_2(%arg0: i32) -> (i32, i32, i32) {
    %c0_i32 = arith.constant 0 : i32
    %c0_i32_0 = arith.constant 0 : i32
    %c0_i32_1 = arith.constant 0 : i32
    return %arg0, %c0_i32, %c0_i32_0 : i32, i32, i32
  }
  func.func @transform_3(%arg0: i32) -> (i32, i32, i32) {
    %c0_i32 = arith.constant 0 : i32
    %c0_i32_0 = arith.constant 0 : i32
    %c0_i32_1 = arith.constant 0 : i32
    return %arg0, %c0_i32, %c0_i32_0 : i32, i32, i32
  }
  func.func @transform_4(%arg0: i32) -> (i32, i32) {
    %c0_i32 = arith.constant 0 : i32
    %c0_i32_0 = arith.constant 0 : i32
    %c0_i32_1 = arith.constant 0 : i32
    return %c0_i32, %c0_i32_0 : i32, i32
  }
  func.func @transform_5(%arg0: i32) -> (i32, i32) {
    %c0_i32 = arith.constant 0 : i32
    %c0_i32_0 = arith.constant 0 : i32
    %c0_i32_1 = arith.constant 0 : i32
    return %c0_i32, %c0_i32_0 : i32, i32
  }
  func.func @transform_6(%arg0: i32) -> (i32, i32) {
    %c0_i32 = arith.constant 0 : i32
    %c0_i32_0 = arith.constant 0 : i32
    %c0_i32_1 = arith.constant 0 : i32
    return %c0_i32, %c0_i32_0 : i32, i32
  }
  func.func @transform_7(%arg0: i32) -> (i32, i32) {
    %c0_i32 = arith.constant 0 : i32
    %c0_i32_0 = arith.constant 0 : i32
    %c0_i32_1 = arith.constant 0 : i32
    return %c0_i32, %c0_i32_0 : i32, i32
  }
  func.func @transform_8(%arg0: i32) -> (i32, i32, i32) {
    %c0_i32 = arith.constant 0 : i32
    %c0_i32_0 = arith.constant 0 : i32
    %c0_i32_1 = arith.constant 0 : i32
    return %arg0, %c0_i32, %c0_i32_0 : i32, i32, i32
  }
  func.func @transform_9(%arg0: i32) -> (i32, i32, i32) {
    %c0_i32 = arith.constant 0 : i32
    %c0_i32_0 = arith.constant 0 : i32
    %c0_i32_1 = arith.constant 0 : i32
    return %arg0, %c0_i32, %c0_i32_0 : i32, i32, i32
  }
  func.func @transform_10(%arg0: i32) -> (i32, i32) {
    %c0_i32 = arith.constant 0 : i32
    %c0_i32_0 = arith.constant 0 : i32
    %c0_i32_1 = arith.constant 0 : i32
    return %c0_i32, %c0_i32_0 : i32, i32
  }
}

</mosaic_0001>

<llo_original>
// kernel: decoder_forward.1
$region0: #{decoder_forward.1}
  #allocation0 [shape = 'u32[]', space=smem, size = 0x4, offset = 0x4, fixed_abs, tag = 'smem constant byte address 0x4 - core index']
  #allocation1 [shape = 'u32[72,128]{1,0:T(1,128)}', space=vmem, size = 0x9000, scoped, tag = 'internal scratch']
  #allocation2 [shape = 'f32[8,32]{1,0:T(8,128)}', space=vmem, size = 0x1000, scoped, tag = 'scratch operand']
  %s0 = inlined_call_operand.vmem [shape: s32[1,8,1], index: 0, kind: input, shape index: {}]
  %s1 = inlined_call_operand.vmem [shape: f32[1,8,1], index: 1, kind: input, shape index: {}]
  %s2 = inlined_call_operand.vmem [shape: f32[1,8,128], index: 2, kind: input, shape index: {}]
  %s3 = inlined_call_operand.vmem [shape: f32[1,8,8], index: 3, kind: input, shape index: {}]
  %s4 = inlined_call_operand.vmem [shape: f32[8,32], index: 4, kind: input, shape index: {}]
  %s5 = inlined_call_operand.vmem [shape: f32[176,128], index: 5, kind: input, shape index: {}]
  %s6 = inlined_call_operand.vmem [shape: f32[40,128], index: 6, kind: input, shape index: {}]
  %s7 = inlined_call_operand.vmem [shape: f32[192,32], index: 7, kind: input, shape index: {}]
  %s8 = inlined_call_operand.vmem [shape: f32[1,8,128], index: 8, kind: output, shape index: {0}]
  %s9 = inlined_call_operand.vmem [shape: f32[1,8,1], index: 9, kind: output, shape index: {1}]
  %s10 = inlined_call_operand.vmem [shape: f32[8,32], index: 10, kind: output, shape index: {2}]
  %11 = xla_tuple %s8, %s9, %s10
  %s12 = sld [smem:[#allocation0]]
  $region66: #{decoder_forward.1} parent=0
    _
  %s14 = ssub.s32 1, %s12
  %s15 = scalar_select 0, %s14, %s12
  // Predicated region
  $region2: #{decoder_forward.1} parent=0 // pred_check
    _
  $region3: #{decoder_forward.1} parent=0 // pred_check_branch
    %17 = sbr.rel (0) target = $region5
  $region4: #{decoder_forward.1} parent=0 // pred_region
    _
  $region5: #{decoder_forward.1} parent=0 // pred_fallthru
    _
  // Predicated region
  $region6: #{decoder_forward.1} parent=0 // pred_check
    _
  $region7: #{decoder_forward.1} parent=0 // pred_check_branch
    %19 = sbr.rel (0) target = $region9
  $region8: #{decoder_forward.1} parent=0 // pred_region
    _
  $region9: #{decoder_forward.1} parent=0 // pred_fallthru
    _
  // Predicated region
  $region10: #{decoder_forward.1} parent=0 // pred_check
    _
  $region11: #{decoder_forward.1} parent=0 // pred_check_branch
    %21 = sbr.rel (0) target = $region13
  $region12: #{decoder_forward.1} parent=0 // pred_region
    _
  $region13: #{decoder_forward.1} parent=0 // pred_fallthru
    _
  // Predicated region
  $region14: #{decoder_forward.1} parent=0 // pred_check
    _
  $region15: #{decoder_forward.1} parent=0 // pred_check_branch
    %23 = sbr.rel (0) target = $region17
  $region16: #{decoder_forward.1} parent=0 // pred_region
    _
  $region17: #{decoder_forward.1} parent=0 // pred_fallthru
    _
  // Predicated region
  $region18: #{decoder_forward.1} parent=0 // pred_check
    _
  $region19: #{decoder_forward.1} parent=0 // pred_check_branch
    %25 = sbr.rel (0) target = $region21
  $region20: #{decoder_forward.1} parent=0 // pred_region
    _
  $region21: #{decoder_forward.1} parent=0 // pred_fallthru
    _
  // Predicated region
  $region22: #{decoder_forward.1} parent=0 // pred_check
    _
  $region23: #{decoder_forward.1} parent=0 // pred_check_branch
    %27 = sbr.rel (0) target = $region25
  $region24: #{decoder_forward.1} parent=0 // pred_region
    _
  $region25: #{decoder_forward.1} parent=0 // pred_fallthru
    _
  // Predicated region
  $region26: #{decoder_forward.1} parent=0 // pred_check
    _
  $region27: #{decoder_forward.1} parent=0 // pred_check_branch
    %29 = sbr.rel (0) target = $region29
  $region28: #{decoder_forward.1} parent=0 // pred_region
    _
  $region29: #{decoder_forward.1} parent=0 // pred_fallthru
    _
  // Predicated region
  $region30: #{decoder_forward.1} parent=0 // pred_check
    _
  $region31: #{decoder_forward.1} parent=0 // pred_check_branch
    %31 = sbr.rel (0) target = $region33
  $region32: #{decoder_forward.1} parent=0 // pred_region
    _
  $region33: #{decoder_forward.1} parent=0 // pred_fallthru
    _
  %p32 = scmp.eq.s32.totalorder 0, 0
  // Predicated region
  $region34: #{decoder_forward.1} parent=0 // pred_check
    %p33 = pneg %p32
  $region35: #{decoder_forward.1} parent=0 // pred_check_branch
    %35 = sbr.rel (%p33) target = $region37
  $region36: #{decoder_forward.1} parent=0 // pred_region
    %v36 = vld [vmem:[%s4] sm:$0xff]
    %vm37 = vcmask 261120
    %38 = vst.msk [vmem:[#allocation2] sm:$0xff] %vm37, %v36
  $region37: #{decoder_forward.1} parent=0 // pred_fallthru
    _
  %v39 = vld [vmem:[%s0] sm:$0xff]
  %v40 = vld [vmem:[%s1] sm:$0xff]
  %v41 = vld [vmem:[%s2] sm:$0xff]
  %v42 = vld [vmem:[#allocation2] sm:$0xff]
  %v43 = vlaneseq
  %v44 = vand.u32 %v43, 127
  %45 = vset.pattern.permute.xlu0 0
  %46 = vperm.xlu0 %45, %v39
  %v47 = vpop.permute.xlu0 %46
  %vm48 = vcmp.eq.s32.totalorder %v44, %v47
  %v49 = vsel %vm48, 1, 0
  %v50 = vcvt.s32.f32 %v49
  %v51 = vld [vmem:[%s5] sm:$0xff]
  %v52 = vld [vmem:[%s5 + $0x8] sm:$0xff]
  %v53 = vld [vmem:[%s5 + $0x10] sm:$0xff]
  %v54 = vld [vmem:[%s5 + $0x18] sm:$0xff]
  %v55 = vld [vmem:[%s5 + $0x20] sm:$0xff]
  %v56 = vld [vmem:[%s5 + $0x28] sm:$0xff]
  %v57 = vld [vmem:[%s5 + $0x30] sm:$0xff]
  %v58 = vld [vmem:[%s5 + $0x38] sm:$0xff]
  %v59 = vld [vmem:[%s5 + $0x40] sm:$0xff]
  %v60 = vld [vmem:[%s5 + $0x48] sm:$0xff]
  %v61 = vld [vmem:[%s5 + $0x50] sm:$0xff]
  %v62 = vld [vmem:[%s5 + $0x58] sm:$0xff]
  %v63 = vld [vmem:[%s5 + $0x60] sm:$0xff]
  %v64 = vld [vmem:[%s5 + $0x68] sm:$0xff]
  %v65 = vld [vmem:[%s5 + $0x70] sm:$0xff]
  %v66 = vld [vmem:[%s5 + $0x78] sm:$0xff]
  %v67 = vld [vmem:[%s5 + $0x80] sm:$0xff]
  %v68 = vld [vmem:[%s5 + $0x88] sm:$0xff]
  %v69 = vld [vmem:[%s5 + $0x90] sm:$0xff]
  %v70 = vld [vmem:[%s5 + $0x98] sm:$0xff]
  %vm71 = vcmask 261120
  %v73 = vsel %vm71, %v42, 0
  %75 = vmatpush.msra.mxu0 0.0
  %76 = vmatpush.msra.mxu0 0.0
  %77 = vmatpush.msra.mxu0 0.0
  %78 = vmatpush.msra.mxu0 0.0
  %79 = vmatpush.msra.mxu0 0.0
  %80 = vmatpush.msra.mxu0 0.0
  %81 = vmatpush.msra.mxu0 0.0
  %82 = vmatpush.msra.mxu0 0.0
  %83 = vmatpush.msra.mxu0 0.0
  %84 = vmatpush.msra.mxu0 0.0
  %85 = vmatpush.msra.mxu0 0.0
  %86 = vmatpush.msra.mxu0 0.0
  %87 = vmatpush.msra.mxu0 %v70
  %88 = vmatpush.msra.mxu0 %v69
  %89 = vmatpush.msra.mxu0 %v68
  %90 = vmatpush.msra.mxu0 %v67
  %91 = vmatmul.f32.gmra.mxu0 %v73
  %v92 = vpop.f32.mrf.mxu0
  %v93 = vadd.f32 0.0, %v92
  %94 = vdwg.mxu0
  %95 = vmatpush.msra.mxu0 %v66
  %96 = vmatpush.msra.mxu0 %v65
  %97 = vmatpush.msra.mxu0 %v64
  %98 = vmatpush.msra.mxu0 %v63
  %99 = vmatpush.msra.mxu0 %v62
  %100 = vmatpush.msra.mxu0 %v61
  %101 = vmatpush.msra.mxu0 %v60
  %102 = vmatpush.msra.mxu0 %v59
  %103 = vmatpush.msra.mxu0 %v58
  %104 = vmatpush.msra.mxu0 %v57
  %105 = vmatpush.msra.mxu0 %v56
  %106 = vmatpush.msra.mxu0 %v55
  %107 = vmatpush.msra.mxu0 %v54
  %108 = vmatpush.msra.mxu0 %v53
  %109 = vmatpush.msra.mxu0 %v52
  %110 = vmatpush.msra.mxu0 %v51
  %111 = vmatmul.f32.gmra.mxu0 %v50
  %v112 = vpop.f32.mrf.mxu0
  %v113 = vadd.f32 %v93, %v112
  %114 = vdwg.mxu0
  %v115 = vld [vmem:[%s5 + $0xa0] sm:$0x1]
  %117 = vset.pattern.permute.xlu0 0
  %118 = vperm.xlu0 %117, %v40
  %v119 = vpop.permute.xlu0 %118
  %v121 = vperm.slane %v115, 0
  %v122 = vmul.f32 %v119, %v121
  %v123 = vadd.f32 %v113, %v122
  %v124 = vld [vmem:[%s5 + $0xa8] sm:$0x1]
  %v125 = vperm.slane %v124, 0
  %v126 = vadd.f32 %v123, %v125
  %v127 = vxor.u32 %v126, 2147483648
  %v128 = vmul.f32 %v127, 1.442695
  %v129 = vpow.pop %v128
  %v130 = vadd.f32 %v129, 1.0
  %v131 = vrcp.pop %v130
  %v132 = vmul.f32 %v130, %v131
  %v133 = vsub.f32 1.0, %v132
  %v134 = vmul.f32 %v131, %v133
  %v135 = vadd.f32 %v131, %v134
  %vm136 = vweird.f32 %v130
  %vm137 = vweird.f32 %v131
  %vm138 = vmor %vm136, %vm137
  %v139 = vsel %vm138, %v131, %v135
  %v140 = vand.u32 2147483647, %v130
  %vm141 = vcmp.eq.f32.partialorder %v140, 8.507059e+37
  %v142 = vand.u32 %v130, 2147483648
  %v143 = vor.u32 1.1754944e-38, %v142
  %v144 = vsel %vm141, %v143, %v139
  %v145 = vmul.f32 1.0, %v144
  %147 = vrot.lane.b32.xlu0 %v126, 32
  %v148 = vpop.permute.xlu0 %147
  %v150 = vmul.f32 %v145, %v148
  %152 = vrot.lane.b32.xlu0 %v150, 64
  %v153 = vpop.permute.xlu0 %152
  %v155 = vadd.f32 %v126, %v153
  %v156 = vtanh.pop %v155
  %v157 = vsub.f32 1.0, %v145
  %159 = vrot.lane.b32.xlu0 %v156, 96
  %v160 = vpop.permute.xlu0 %159
  %v162 = vmul.f32 %v157, %v160
  %163 = vrot.lane.b32.xlu0 %v42, 32
  %v164 = vpop.permute.xlu0 %163
  %v166 = vmul.f32 %v145, %v164
  %v167 = vadd.f32 %v162, %v166
  %169 = vrot.lane.b32.xlu0 %v167, 96
  %v170 = vpop.permute.xlu0 %169
  %172 = vst.msk [vmem:[#allocation2] sm:$0xff] %vm71, %v170
  %v173 = vld [vmem:[%s6] sm:$0xff]
  %v174 = vld [vmem:[%s6 + $0x8] sm:$0xff]
  %v175 = vld [vmem:[%s6 + $0x10] sm:$0xff]
  %v176 = vld [vmem:[%s6 + $0x18] sm:$0xff]
  %v177 = vld [vmem:[%s6 + $0x20] sm:$0x1]
  %v178 = vperm.slane %v177, 0
  %v179 = vsel %vm71, %v170, 0
  %181 = vmatpush.msra.mxu0 0.0
  %182 = vmatpush.msra.mxu0 0.0
  %183 = vmatpush.msra.mxu0 0.0
  %184 = vmatpush.msra.mxu0 0.0
  %185 = vmatpush.msra.mxu0 0.0
  %186 = vmatpush.msra.mxu0 0.0
  %187 = vmatpush.msra.mxu0 0.0
  %188 = vmatpush.msra.mxu0 0.0
  %189 = vmatpush.msra.mxu0 0.0
  %190 = vmatpush.msra.mxu0 0.0
  %191 = vmatpush.msra.mxu0 0.0
  %192 = vmatpush.msra.mxu0 0.0
  %193 = vmatpush.msra.mxu0 %v176
  %194 = vmatpush.msra.mxu0 %v175
  %195 = vmatpush.msra.mxu0 %v174
  %196 = vmatpush.msra.mxu0 %v173
  %197 = vmatmul.f32.gmra.mxu0 %v179
  %v198 = vpop.f32.mrf.mxu0
  %v199 = vadd.f32 %v178, %v198
  %200 = vdwg.mxu0
  %vm201 = vcmp.gt.f32.partialorder %v41, 0.0
  %v202 = vsel %vm201, %v199, -inf
  %203 = vmax.xlane.f32.xlu0 %v202
  %v204 = vpop.xlane.xlu0 %203
  %vm205 = vcmp.eq.f32.partialorder %v202, %v204
  %v206 = vsel %vm205, %v44, 128
  %v207 = vand.u32 %v206, 65535
  %v208 = vshra.s32 %v206, 16
  %v209 = vcvt.s32.f32 %v207
  %v210 = vcvt.s32.f32 %v208
  %211 = vmin.xlane.f32.xlu0 %v210
  %v212 = vpop.xlane.xlu0 %211
  %vm213 = vcmp.eq.f32.partialorder %v210, %v212
  %v214 = vsel %vm213, %v209, inf
  %215 = vmin.xlane.f32.xlu0 %v214
  %v216 = vpop.xlane.xlu0 %215
  %v217 = vcvt.f32.s32 %v216
  %v218 = vcvt.f32.s32 %v212
  %v219 = vshll.u32 %v218, 16
  %v220 = vadd.s32 %v219, %v217
  %vm221 = vcmp.eq.s32.totalorder %v44, %v220
  %v222 = vsel %vm221, 1, 0
  %v223 = vcvt.s32.f32 %v222
  %v224 = vsub.f32 %v199, %v204
  %v225 = vmul.f32 %v224, 1.442695
  %v226 = vpow.pop %v225
  %v227 = vsel %vm201, %v226, 0.0
  %228 = vadd.xlane.f32.xlu0 %v227
  %v229 = vpop.xlane.xlu0 %228
  %v230 = vlog2.pop %v229
  %v231 = vmul.f32 %v230, 0.6931472
  %v232 = vsub.f32 %v224, %v231
  %v233 = vsel %vm201, %v232, -inf
  %234 = vst [vmem:[%s8] sm:$0xff] %v233
  %v235 = vld [vmem:[%s7] sm:$0xff]
  %v236 = vld [vmem:[%s7 + $0x8] sm:$0xff]
  %v237 = vld [vmem:[%s7 + $0x10] sm:$0xff]
  %v238 = vld [vmem:[%s7 + $0x18] sm:$0xff]
  %v239 = vld [vmem:[%s7 + $0x20] sm:$0xff]
  %v240 = vld [vmem:[%s7 + $0x28] sm:$0xff]
  %v241 = vld [vmem:[%s7 + $0x30] sm:$0xff]
  %v242 = vld [vmem:[%s7 + $0x38] sm:$0xff]
  %v243 = vld [vmem:[%s7 + $0x40] sm:$0xff]
  %v244 = vld [vmem:[%s7 + $0x48] sm:$0xff]
  %v245 = vld [vmem:[%s7 + $0x50] sm:$0xff]
  %v246 = vld [vmem:[%s7 + $0x58] sm:$0xff]
  %v247 = vld [vmem:[%s7 + $0x60] sm:$0xff]
  %v248 = vld [vmem:[%s7 + $0x68] sm:$0xff]
  %v249 = vld [vmem:[%s7 + $0x70] sm:$0xff]
  %v250 = vld [vmem:[%s7 + $0x78] sm:$0xff]
  %v251 = vld [vmem:[%s7 + $0x80] sm:$0xff]
  %v252 = vld [vmem:[%s7 + $0x88] sm:$0xff]
  %v253 = vld [vmem:[%s7 + $0x90] sm:$0xff]
  %v254 = vld [vmem:[%s7 + $0x98] sm:$0xff]
  %255 = vmatpush.msra.mxu0 0.0
  %256 = vmatpush.msra.mxu0 0.0
  %257 = vmatpush.msra.mxu0 0.0
  %258 = vmatpush.msra.mxu0 0.0
  %259 = vmatpush.msra.mxu0 0.0
  %260 = vmatpush.msra.mxu0 0.0
  %261 = vmatpush.msra.mxu0 0.0
  %262 = vmatpush.msra.mxu0 0.0
  %263 = vmatpush.msra.mxu0 0.0
  %264 = vmatpush.msra.mxu0 0.0
  %265 = vmatpush.msra.mxu0 0.0
  %266 = vmatpush.msra.mxu0 0.0
  %267 = vmatpush.msra.mxu0 %v254
  %268 = vmatpush.msra.mxu0 %v253
  %269 = vmatpush.msra.mxu0 %v252
  %270 = vmatpush.msra.mxu0 %v251
  %271 = vmatmul.f32.gmra.mxu0 %v179
  %v272 = vpop.f32.mrf.mxu0
  %v273 = vadd.f32 0.0, %v272
  %274 = vdwg.mxu0
  %275 = vmatpush.msra.mxu0 %v250
  %276 = vmatpush.msra.mxu0 %v249
  %277 = vmatpush.msra.mxu0 %v248
  %278 = vmatpush.msra.mxu0 %v247
  %279 = vmatpush.msra.mxu0 %v246
  %280 = vmatpush.msra.mxu0 %v245
  %281 = vmatpush.msra.mxu0 %v244
  %282 = vmatpush.msra.mxu0 %v243
  %283 = vmatpush.msra.mxu0 %v242
  %284 = vmatpush.msra.mxu0 %v241
  %285 = vmatpush.msra.mxu0 %v240
  %286 = vmatpush.msra.mxu0 %v239
  %287 = vmatpush.msra.mxu0 %v238
  %288 = vmatpush.msra.mxu0 %v237
  %289 = vmatpush.msra.mxu0 %v236
  %290 = vmatpush.msra.mxu0 %v235
  %291 = vmatmul.f32.gmra.mxu0 %v223
  %v292 = vpop.f32.mrf.mxu0
  %v293 = vadd.f32 %v273, %v292
  %294 = vdwg.mxu0
  %v295 = vld [vmem:[%s7 + $0xa0] sm:$0x1]
  %v296 = vperm.slane %v295, 0
  %v297 = vadd.f32 %v293, %v296
  %v298 = vmax.f32 %v297, 0.0
  %v299 = vld [vmem:[%s3] sm:$0xff]
  %v300 = vld [vmem:[%s7 + $0xa8] sm:$0x1]
  %v301 = vld [vmem:[%s7 + $0xb0] sm:$0x1]
  %v302 = vld [vmem:[%s7 + $0xb8] sm:$0x1]
  %v303 = vperm.slane %v300, 0
  %v304 = vmul.f32 %v298, %v303
  %v305 = vsel %vm71, %v304, 0.0
  %306 = vadd.xlane.f32.xlu0 %v305
  %v307 = vpop.xlane.xlu0 %306
  %v308 = vperm.slane %v301, 0
  %v309 = vmul.f32 %v299, %v308
  %vm310 = vcmask 64512
  %v311 = vsel %vm310, %v309, 0.0
  %312 = vadd.xlane.f32.xlu0 %v311
  %v313 = vpop.xlane.xlu0 %312
  %v314 = vadd.f32 %v307, %v313
  %v315 = vperm.slane %v302, 0
  %v316 = vadd.f32 %v314, %v315
  %v317 = vxor.u32 %v316, 2147483648
  %v318 = vmul.f32 %v317, 1.442695
  %v319 = vpow.pop %v318
  %v320 = vadd.f32 %v319, 1.0
  %v321 = vrcp.pop %v320
  %v322 = vmul.f32 %v320, %v321
  %v323 = vsub.f32 1.0, %v322
  %v324 = vmul.f32 %v321, %v323
  %v325 = vadd.f32 %v321, %v324
  %vm326 = vweird.f32 %v320
  %vm327 = vweird.f32 %v321
  %vm328 = vmor %vm326, %vm327
  %v329 = vsel %vm328, %v321, %v325
  %v330 = vand.u32 2147483647, %v320
  %vm331 = vcmp.eq.f32.partialorder %v330, 8.507059e+37
  %v332 = vand.u32 %v320, 2147483648
  %v333 = vor.u32 1.1754944e-38, %v332
  %v334 = vsel %vm331, %v333, %v329
  %v335 = vmul.f32 1.0, %v334
  %vm336 = vcmask 7168
  %337 = vst.msk [vmem:[%s9] sm:$0xff] %vm336, %v335
  // Predicated region
  $region38: #{decoder_forward.1} parent=0 // pred_check
    %p338 = pneg %p32
  $region39: #{decoder_forward.1} parent=0 // pred_check_branch
    %340 = sbr.rel (%p338) target = $region41
  $region40: #{decoder_forward.1} parent=0 // pred_region
    %341 = vst.msk [vmem:[%s10] sm:$0xff] %vm71, %v170
  $region41: #{decoder_forward.1} parent=0 // pred_fallthru
    _
  // Predicated region
  $region42: #{decoder_forward.1} parent=0 // pred_check
    _
  $region43: #{decoder_forward.1} parent=0 // pred_check_branch
    %343 = sbr.rel (0) target = $region45
  $region44: #{decoder_forward.1} parent=0 // pred_region
    _
  $region45: #{decoder_forward.1} parent=0 // pred_fallthru
    _
  // Predicated region
  $region46: #{decoder_forward.1} parent=0 // pred_check
    _
  $region47: #{decoder_forward.1} parent=0 // pred_check_branch
    %345 = sbr.rel (0) target = $region49
  $region48: #{decoder_forward.1} parent=0 // pred_region
    _
  $region49: #{decoder_forward.1} parent=0 // pred_fallthru
    _
  // Predicated region
  $region50: #{decoder_forward.1} parent=0 // pred_check
    _
  $region51: #{decoder_forward.1} parent=0 // pred_check_branch
    %347 = sbr.rel (0) target = $region53
  $region52: #{decoder_forward.1} parent=0 // pred_region
    _
  $region53: #{decoder_forward.1} parent=0 // pred_fallthru
    _
  // Predicated region
  $region54: #{decoder_forward.1} parent=0 // pred_check
    _
  $region55: #{decoder_forward.1} parent=0 // pred_check_branch
    %349 = sbr.rel (0) target = $region57
  $region56: #{decoder_forward.1} parent=0 // pred_region
    _
  $region57: #{decoder_forward.1} parent=0 // pred_fallthru
    _
  // Predicated region
  $region58: #{decoder_forward.1} parent=0 // pred_check
    _
  $region59: #{decoder_forward.1} parent=0 // pred_check_branch
    %351 = sbr.rel (0) target = $region61
  $region60: #{decoder_forward.1} parent=0 // pred_region
    _
  $region61: #{decoder_forward.1} parent=0 // pred_fallthru
    _
  // Predicated region
  $region62: #{decoder_forward.1} parent=0 // pred_check
    _
  $region63: #{decoder_forward.1} parent=0 // pred_check_branch
    %353 = sbr.rel (0) target = $region65
  $region64: #{decoder_forward.1} parent=0 // pred_region
    _
  $region65: #{decoder_forward.1} parent=0 // pred_fallthru
    _

</llo_original>
